<compile_context>
chip_gen: v7x
topology: tpu7x:2x2x1
jax: 0.10.0
libtpu: 0.0.40
codegen_flags: <defaults>
</compile_context>

<pallas_src>
import jax
import jax.numpy as jnp
from jax.experimental import pallas as pl
from jax.experimental.pallas import tpu as pltpu

CALEC_DIM = 1024
ROBERTA_DIM = 768


def _logits_kernel(calec_ref, rob_ref, wc_ref, wr_ref, b_ref, logits_ref):
    # calec_ref: (TM, 1024) bf16 tile      rob_ref: (TM, 768) bf16 tile
    # wc_ref: (1024, 1) bf16, wr_ref: (768, 1) bf16 (VMEM-resident, constant idx)
    # b_ref: (1,) f32 in SMEM              logits_ref: (TM, 1) f32
    acc = jnp.dot(calec_ref[...], wc_ref[...],
                  preferred_element_type=jnp.float32)
    acc = acc + jnp.dot(rob_ref[...], wr_ref[...],
                        preferred_element_type=jnp.float32)
    logits_ref[...] = acc + b_ref[0]


def dual_ensemble_head(calec_out, roberta_pooled, w, b, label=None,
                       num_labels=4, block_rows=1024):
    """calec_out: (N, 1024), roberta_pooled: (N, 768), N = batch * num_labels,
    stored in whatever dtype the backbones emit (bf16 recommended; features are
    fed to the MXU in that dtype, no upcast).  w: (1, 1792) classifier weight
    (CALeC block first, matching torch.concat order), b: (1,), label:
    probability targets reshapable to (batch, num_labels) or None.
    Returns (loss | None, reshaped_logits)."""
    N = calec_out.shape[0]
    assert N % num_labels == 0, "rows must be a multiple of num_labels"
    batch = N // num_labels

    # Row tile: either the whole (small) input or an aligned 1024-row tile;
    # ragged last block is handled by Pallas (no jnp.pad HBM copy).
    tm = min(block_rows, N)
    grid = (pl.cdiv(N, tm),)

    # Split the (1, 1792) weight so the concat never has to be materialized;
    # keep the weights in the feature dtype so the MXU runs a narrow pass with
    # an f32 accumulator (preferred_element_type above).
    feat_dtype = calec_out.dtype
    wc = w[:, :CALEC_DIM].reshape(CALEC_DIM, 1).astype(feat_dtype)
    wr = w[:, CALEC_DIM:].reshape(ROBERTA_DIM, 1).astype(feat_dtype)
    bias = b.reshape(1).astype(jnp.float32)

    logits = pl.pallas_call(
        _logits_kernel,
        out_shape=jax.ShapeDtypeStruct((N, 1), jnp.float32),
        grid=grid,
        in_specs=[
            pl.BlockSpec((tm, CALEC_DIM), lambda i: (i, 0)),      # calec rows
            pl.BlockSpec((tm, ROBERTA_DIM), lambda i: (i, 0)),    # roberta rows
            pl.BlockSpec((CALEC_DIM, 1), lambda i: (0, 0)),       # wc (resident)
            pl.BlockSpec((ROBERTA_DIM, 1), lambda i: (0, 0)),     # wr (resident)
            pl.BlockSpec(memory_space=pltpu.MemorySpace.SMEM),    # bias scalar
        ],
        out_specs=pl.BlockSpec((tm, 1), lambda i: (i, 0)),
        compiler_params=pltpu.CompilerParams(
            dimension_semantics=("parallel",),                    # v7x dual-TC
            vmem_limit_bytes=32 * 1024 * 1024),
    )(calec_out, roberta_pooled, wc, wr, bias)

    reshaped_logits = logits.reshape(batch, num_labels)

    loss = None
    if label is not None:
        # Tiny (batch, num_labels) soft-target CE: plain JAX (XLA fuses it);
        # a separate pallas_call would cost more in dispatch + HBM round trip
        # than the compute itself.
        label2 = label.reshape(batch, num_labels).astype(jnp.float32)
        logp = jax.nn.log_softmax(reshaped_logits, axis=-1)
        loss = -jnp.mean(jnp.sum(label2 * logp, axis=-1))

    return loss, reshaped_logits


if __name__ == "__main__":
    key = jax.random.PRNGKey(0)
    batch, num_labels = 2, 4
    N = batch * num_labels
    k1, k2, k3, k4, k5 = jax.random.split(key, 5)

    # TODO(synk): the CALeC and RoBERTa backbones are external pretrained
    # submodules passed into __init__; stand in for their pooled encoder outputs
    # (and CALeC's align_loss) with synthetic tensors, stored in bf16 to halve
    # HBM traffic on the bandwidth-bound head.
    calec_out = jax.random.normal(k1, (N, CALEC_DIM), jnp.float32).astype(jnp.bfloat16)
    roberta_pooled = jax.random.normal(k2, (N, ROBERTA_DIM), jnp.float32).astype(jnp.bfloat16)
    align_loss = jnp.float32(0.0)

    # nn.Linear(1024 + 768, 1) default init: U(-1/sqrt(fan_in), 1/sqrt(fan_in))
    fan_in = CALEC_DIM + ROBERTA_DIM
    bound = 1.0 / (fan_in ** 0.5)
    w = jax.random.uniform(k3, (1, fan_in), jnp.float32, -bound, bound)
    b = jax.random.uniform(k4, (1,), jnp.float32, -bound, bound)

    # label.view(reshaped_logits.size()) => probability targets (batch, num_labels)
    label_idx = jax.random.randint(k5, (batch,), 0, num_labels)
    label = jax.nn.one_hot(label_idx, num_labels, dtype=jnp.float32)

    loss, reshaped_logits = dual_ensemble_head(
        calec_out, roberta_pooled, w, b, label, num_labels)
    jax.block_until_ready((loss, reshaped_logits))

    # pure-JAX reference check (same bf16 encoder outputs, f32 weight math;
    # the kernel uses bf16 weights with f32 MXU accumulation, so allow 1e-2)
    ens = jnp.concatenate([calec_out.astype(jnp.float32),
                           roberta_pooled.astype(jnp.float32)], axis=-1)
    ref_logits = (ens @ w.T + b).reshape(batch, num_labels)
    ref_logp = jax.nn.log_softmax(ref_logits, axis=-1)
    ref_loss = -jnp.mean(jnp.sum(label * ref_logp, axis=-1))
    assert jnp.allclose(reshaped_logits, ref_logits, atol=1e-2, rtol=1e-2)
    assert jnp.allclose(loss, ref_loss, atol=1e-2, rtol=1e-2)

    outputs = (loss, align_loss, reshaped_logits)  # matches torch return tuple
    print("KERNEL_OK")
</pallas_src>

<mosaic_0001>
module attributes {stable_mosaic.version = 11 : i64} {
  func.func @_logits_kernel(%arg0: i32, %arg1: memref<8x1024xbf16, #tpu.memory_space<vmem>>, %arg2: memref<8x768xbf16, #tpu.memory_space<vmem>>, %arg3: memref<1024x1xbf16, #tpu.memory_space<vmem>>, %arg4: memref<768x1xbf16, #tpu.memory_space<vmem>>, %arg5: memref<1xf32, #tpu.memory_space<smem>>, %arg6: memref<8x1xf32, #tpu.memory_space<vmem>>) attributes {dimension_semantics = [#tpu.dimension_semantics<parallel>], iteration_bounds = array<i64: 1>, scalar_prefetch = 0 : i64, scratch_operands = 0 : i64, tpu.core_type = #tpu.core_type<tc>, window_params = [{transform_indices = @transform_0, window_bounds = array<i64: 8, 1024>}, {transform_indices = @transform_1, window_bounds = array<i64: 8, 768>}, {pipeline_mode = #tpu.pipeline_mode<synchronous>, transform_indices = @transform_2, window_bounds = array<i64: 1024, 1>}, {pipeline_mode = #tpu.pipeline_mode<synchronous>, transform_indices = @transform_3, window_bounds = array<i64: 768, 1>}, {transform_indices = @transform_4, window_bounds = array<i64: 1>}, {transform_indices = @transform_5, window_bounds = array<i64: 8, 1>}]} {
    %c0 = arith.constant 0 : index
    %c0_0 = arith.constant 0 : index
    %0 = vector.load %arg1[%c0, %c0_0] : memref<8x1024xbf16, #tpu.memory_space<vmem>>, vector<8x1024xbf16>
    %c0_1 = arith.constant 0 : index
    %c0_2 = arith.constant 0 : index
    %1 = vector.load %arg3[%c0_1, %c0_2] : memref<1024x1xbf16, #tpu.memory_space<vmem>>, vector<1024x1xbf16>
    %cst = arith.constant dense<0.000000e+00> : vector<8x1xf32>
    %2 = tpu.matmul %0, %1, %cst {dimension_numbers = #tpu.dot_dimension_numbers<[1], [0], [0], [1], [0, 0, 1, 1], [], []>} : vector<8x1024xbf16>, vector<1024x1xbf16>, vector<8x1xf32> -> vector<8x1xf32>
    %c0_3 = arith.constant 0 : index
    %c0_4 = arith.constant 0 : index
    %3 = vector.load %arg2[%c0_3, %c0_4] : memref<8x768xbf16, #tpu.memory_space<vmem>>, vector<8x768xbf16>
    %c0_5 = arith.constant 0 : index
    %c0_6 = arith.constant 0 : index
    %4 = vector.load %arg4[%c0_5, %c0_6] : memref<768x1xbf16, #tpu.memory_space<vmem>>, vector<768x1xbf16>
    %cst_7 = arith.constant dense<0.000000e+00> : vector<8x1xf32>
    %5 = tpu.matmul %3, %4, %cst_7 {dimension_numbers = #tpu.dot_dimension_numbers<[1], [0], [0], [1], [0, 0, 1, 1], [], []>} : vector<8x768xbf16>, vector<768x1xbf16>, vector<8x1xf32> -> vector<8x1xf32>
    %6 = arith.addf %2, %5 : vector<8x1xf32>
    %c0_8 = arith.constant 0 : index
    %7 = memref.load %arg5[%c0_8] : memref<1xf32, #tpu.memory_space<smem>>
    %8 = vector.broadcast %7 : f32 to vector<8x1xf32>
    %9 = arith.addf %6, %8 : vector<8x1xf32>
    %c0_9 = arith.constant 0 : index
    %c0_10 = arith.constant 0 : index
    %10 = vector.load %arg6[%c0_9, %c0_10] : memref<8x1xf32, #tpu.memory_space<vmem>>, vector<8x1xf32>
    tpu.vector_store %arg6[%c0_9, %c0_10], %9 {strides = array<i32>} : memref<8x1xf32, #tpu.memory_space<vmem>>, vector<8x1xf32>,
    return
  }
  func.func @transform_0(%arg0: i32) -> (i32, i32) {
    %c0_i32 = arith.constant 0 : i32
    %c0_i32_0 = arith.constant 0 : i32
    return %arg0, %c0_i32 : i32, i32
  }
  func.func @transform_1(%arg0: i32) -> (i32, i32) {
    %c0_i32 = arith.constant 0 : i32
    %c0_i32_0 = arith.constant 0 : i32
    return %arg0, %c0_i32 : i32, i32
  }
  func.func @transform_2(%arg0: i32) -> (i32, i32) {
    %c0_i32 = arith.constant 0 : i32
    %c0_i32_0 = arith.constant 0 : i32
    %c0_i32_1 = arith.constant 0 : i32
    return %c0_i32, %c0_i32_0 : i32, i32
  }
  func.func @transform_3(%arg0: i32) -> (i32, i32) {
    %c0_i32 = arith.constant 0 : i32
    %c0_i32_0 = arith.constant 0 : i32
    %c0_i32_1 = arith.constant 0 : i32
    return %c0_i32, %c0_i32_0 : i32, i32
  }
  func.func @transform_4(%arg0: i32) -> i32 {
    %c0_i32 = arith.constant 0 : i32
    %c0_i32_0 = arith.constant 0 : i32
    return %c0_i32 : i32
  }
  func.func @transform_5(%arg0: i32) -> (i32, i32) {
    %c0_i32 = arith.constant 0 : i32
    %c0_i32_0 = arith.constant 0 : i32
    return %arg0, %c0_i32 : i32, i32
  }
}

</mosaic_0001>

<llo_original>
// kernel: tpu_custom_call.1
$region0: #{tpu_custom_call.1}
  #allocation0 [shape = 'u32[]', space=smem, size = 0x4, offset = 0x4, fixed_abs, tag = 'smem constant byte address 0x4 - core index']
  #allocation1 [shape = 'u32[144,128]{1,0:T(1,128)}', space=vmem, size = 0x12000, scoped, tag = 'internal scratch']
  #allocation2 [shape = 'f32[1]{0:T(128)S(6)}', space=smem, size = 0x200, scoped, tag = 'scoped memory for tpu_custom_call.1']
  %s0 = inlined_call_operand.vmem [shape: bf16[8,1024], index: 0, kind: input, shape index: {}]
  %s1 = inlined_call_operand.vmem [shape: bf16[8,768], index: 1, kind: input, shape index: {}]
  %s2 = inlined_call_operand.vmem [shape: bf16[1024,1], index: 2, kind: input, shape index: {}]
  %s3 = inlined_call_operand.vmem [shape: bf16[768,1], index: 3, kind: input, shape index: {}]
  %s4 = inlined_call_operand.<no memory space> [shape: f32[1], index: 4, kind: input, shape index: {}]
  %s5 = inlined_call_operand.vmem [shape: f32[8,1], index: 5, kind: output, shape index: {}]
  %s6 = sld [smem:[#allocation0]]
  $region30: #{tpu_custom_call.1} parent=0
    _
  %s8 = ssub.s32 1, %s6
  %s9 = scalar_select 0, %s8, %s6
  %10 = sst [smem:[#allocation2]] %s4
  // Predicated region
  $region2: #{tpu_custom_call.1} parent=0 // pred_check
    _
  $region3: #{tpu_custom_call.1} parent=0 // pred_check_branch
    %12 = sbr.rel (0) target = $region5
  $region4: #{tpu_custom_call.1} parent=0 // pred_region
    _
  $region5: #{tpu_custom_call.1} parent=0 // pred_fallthru
    _
  // Predicated region
  $region6: #{tpu_custom_call.1} parent=0 // pred_check
    _
  $region7: #{tpu_custom_call.1} parent=0 // pred_check_branch
    %14 = sbr.rel (0) target = $region9
  $region8: #{tpu_custom_call.1} parent=0 // pred_region
    _
  $region9: #{tpu_custom_call.1} parent=0 // pred_fallthru
    _
  // Predicated region
  $region10: #{tpu_custom_call.1} parent=0 // pred_check
    _
  $region11: #{tpu_custom_call.1} parent=0 // pred_check_branch
    %16 = sbr.rel (0) target = $region13
  $region12: #{tpu_custom_call.1} parent=0 // pred_region
    _
  $region13: #{tpu_custom_call.1} parent=0 // pred_fallthru
    _
  // Predicated region
  $region14: #{tpu_custom_call.1} parent=0 // pred_check
    _
  $region15: #{tpu_custom_call.1} parent=0 // pred_check_branch
    %18 = sbr.rel (0) target = $region17
  $region16: #{tpu_custom_call.1} parent=0 // pred_region
    _
  $region17: #{tpu_custom_call.1} parent=0 // pred_fallthru
    _
  // Predicated region
  $region18: #{tpu_custom_call.1} parent=0 // pred_check
    _
  $region19: #{tpu_custom_call.1} parent=0 // pred_check_branch
    %20 = sbr.rel (0) target = $region21
  $region20: #{tpu_custom_call.1} parent=0 // pred_region
    _
  $region21: #{tpu_custom_call.1} parent=0 // pred_fallthru
    _
  %v22 = vld [vmem:[%s0] sm:$0xff]
  %v23 = vld [vmem:[%s0 + $0x8] sm:$0xff]
  %v24 = vld [vmem:[%s0 + $0x10] sm:$0xff]
  %v25 = vld [vmem:[%s0 + $0x18] sm:$0xff]
  %v26 = vld [vmem:[%s2] sm:$0xf]
  %v27 = vld [vmem:[%s2 + $0x4] sm:$0xf]
  %v28 = vld [vmem:[%s2 + $0x8] sm:$0xf]
  %v29 = vld [vmem:[%s2 + $0xc] sm:$0xf]
  %v30 = vld [vmem:[%s2 + $0x10] sm:$0xf]
  %v31 = vld [vmem:[%s2 + $0x14] sm:$0xf]
  %v32 = vld [vmem:[%s2 + $0x18] sm:$0xf]
  %v33 = vld [vmem:[%s2 + $0x1c] sm:$0xf]
  %v34 = vld [vmem:[%s2 + $0x20] sm:$0xf]
  %v35 = vld [vmem:[%s2 + $0x24] sm:$0xf]
  %v36 = vld [vmem:[%s2 + $0x28] sm:$0xf]
  %v37 = vld [vmem:[%s2 + $0x2c] sm:$0xf]
  %v38 = vld [vmem:[%s2 + $0x30] sm:$0xf]
  %v39 = vld [vmem:[%s2 + $0x34] sm:$0xf]
  %v40 = vld [vmem:[%s2 + $0x38] sm:$0xf]
  %v41 = vld [vmem:[%s2 + $0x3c] sm:$0xf]
  %v42 = vld [vmem:[%s2 + $0x40] sm:$0xf]
  %v43 = vld [vmem:[%s2 + $0x44] sm:$0xf]
  %v44 = vld [vmem:[%s2 + $0x48] sm:$0xf]
  %v45 = vld [vmem:[%s2 + $0x4c] sm:$0xf]
  %v46 = vld [vmem:[%s2 + $0x50] sm:$0xf]
  %v47 = vld [vmem:[%s2 + $0x54] sm:$0xf]
  %v48 = vld [vmem:[%s2 + $0x58] sm:$0xf]
  %v49 = vld [vmem:[%s2 + $0x5c] sm:$0xf]
  %v50 = vld [vmem:[%s2 + $0x60] sm:$0xf]
  %v51 = vld [vmem:[%s2 + $0x64] sm:$0xf]
  %v52 = vld [vmem:[%s2 + $0x68] sm:$0xf]
  %v53 = vld [vmem:[%s2 + $0x6c] sm:$0xf]
  %v54 = vld [vmem:[%s2 + $0x70] sm:$0xf]
  %v55 = vld [vmem:[%s2 + $0x74] sm:$0xf]
  %v56 = vld [vmem:[%s2 + $0x78] sm:$0xf]
  %v57 = vld [vmem:[%s2 + $0x7c] sm:$0xf]
  %v58 = vld [vmem:[%s2 + $0x80] sm:$0xf]
  %v59 = vld [vmem:[%s2 + $0x84] sm:$0xf]
  %v60 = vld [vmem:[%s2 + $0x88] sm:$0xf]
  %v61 = vld [vmem:[%s2 + $0x8c] sm:$0xf]
  %v62 = vld [vmem:[%s2 + $0x90] sm:$0xf]
  %v63 = vld [vmem:[%s2 + $0x94] sm:$0xf]
  %v64 = vld [vmem:[%s2 + $0x98] sm:$0xf]
  %v65 = vld [vmem:[%s2 + $0x9c] sm:$0xf]
  %v66 = vld [vmem:[%s2 + $0xa0] sm:$0xf]
  %v67 = vld [vmem:[%s2 + $0xa4] sm:$0xf]
  %v68 = vld [vmem:[%s2 + $0xa8] sm:$0xf]
  %v69 = vld [vmem:[%s2 + $0xac] sm:$0xf]
  %v70 = vld [vmem:[%s2 + $0xb0] sm:$0xf]
  %v71 = vld [vmem:[%s2 + $0xb4] sm:$0xf]
  %v72 = vld [vmem:[%s2 + $0xb8] sm:$0xf]
  %v73 = vld [vmem:[%s2 + $0xbc] sm:$0xf]
  %v74 = vld [vmem:[%s2 + $0xc0] sm:$0xf]
  %v75 = vld [vmem:[%s2 + $0xc4] sm:$0xf]
  %v76 = vld [vmem:[%s2 + $0xc8] sm:$0xf]
  %v77 = vld [vmem:[%s2 + $0xcc] sm:$0xf]
  %v78 = vld [vmem:[%s2 + $0xd0] sm:$0xf]
  %v79 = vld [vmem:[%s2 + $0xd4] sm:$0xf]
  %v80 = vld [vmem:[%s2 + $0xd8] sm:$0xf]
  %v81 = vld [vmem:[%s2 + $0xdc] sm:$0xf]
  %v82 = vld [vmem:[%s2 + $0xe0] sm:$0xf]
  %v83 = vld [vmem:[%s2 + $0xe4] sm:$0xf]
  %v84 = vld [vmem:[%s2 + $0xe8] sm:$0xf]
  %v85 = vld [vmem:[%s2 + $0xec] sm:$0xf]
  %v86 = vld [vmem:[%s2 + $0xf0] sm:$0xf]
  %v87 = vld [vmem:[%s2 + $0xf4] sm:$0xf]
  %v88 = vld [vmem:[%s2 + $0xf8] sm:$0xf]
  %v89 = vld [vmem:[%s2 + $0xfc] sm:$0xf]
  %v90 = vld [vmem:[%s2 + $0x100] sm:$0xf]
  %v91 = vld [vmem:[%s2 + $0x104] sm:$0xf]
  %v92 = vld [vmem:[%s2 + $0x108] sm:$0xf]
  %v93 = vld [vmem:[%s2 + $0x10c] sm:$0xf]
  %v94 = vld [vmem:[%s2 + $0x110] sm:$0xf]
  %v95 = vld [vmem:[%s2 + $0x114] sm:$0xf]
  %v96 = vld [vmem:[%s2 + $0x118] sm:$0xf]
  %v97 = vld [vmem:[%s2 + $0x11c] sm:$0xf]
  %v98 = vld [vmem:[%s2 + $0x120] sm:$0xf]
  %v99 = vld [vmem:[%s2 + $0x124] sm:$0xf]
  %v100 = vld [vmem:[%s2 + $0x128] sm:$0xf]
  %v101 = vld [vmem:[%s2 + $0x12c] sm:$0xf]
  %v102 = vld [vmem:[%s2 + $0x130] sm:$0xf]
  %v103 = vld [vmem:[%s2 + $0x134] sm:$0xf]
  %v104 = vld [vmem:[%s2 + $0x138] sm:$0xf]
  %v105 = vld [vmem:[%s2 + $0x13c] sm:$0xf]
  %v106 = vld [vmem:[%s2 + $0x140] sm:$0xf]
  %v107 = vld [vmem:[%s2 + $0x144] sm:$0xf]
  %v108 = vld [vmem:[%s2 + $0x148] sm:$0xf]
  %v109 = vld [vmem:[%s2 + $0x14c] sm:$0xf]
  %v110 = vld [vmem:[%s2 + $0x150] sm:$0xf]
  %v111 = vld [vmem:[%s2 + $0x154] sm:$0xf]
  %v112 = vld [vmem:[%s2 + $0x158] sm:$0xf]
  %v113 = vld [vmem:[%s2 + $0x15c] sm:$0xf]
  %v114 = vld [vmem:[%s2 + $0x160] sm:$0xf]
  %v115 = vld [vmem:[%s2 + $0x164] sm:$0xf]
  %v116 = vld [vmem:[%s2 + $0x168] sm:$0xf]
  %v117 = vld [vmem:[%s2 + $0x16c] sm:$0xf]
  %v118 = vld [vmem:[%s2 + $0x170] sm:$0xf]
  %v119 = vld [vmem:[%s2 + $0x174] sm:$0xf]
  %v120 = vld [vmem:[%s2 + $0x178] sm:$0xf]
  %v121 = vld [vmem:[%s2 + $0x17c] sm:$0xf]
  %v122 = vld [vmem:[%s2 + $0x180] sm:$0xf]
  %v123 = vld [vmem:[%s2 + $0x184] sm:$0xf]
  %v124 = vld [vmem:[%s2 + $0x188] sm:$0xf]
  %v125 = vld [vmem:[%s2 + $0x18c] sm:$0xf]
  %v126 = vld [vmem:[%s2 + $0x190] sm:$0xf]
  %v127 = vld [vmem:[%s2 + $0x194] sm:$0xf]
  %v128 = vld [vmem:[%s2 + $0x198] sm:$0xf]
  %v129 = vld [vmem:[%s2 + $0x19c] sm:$0xf]
  %v130 = vld [vmem:[%s2 + $0x1a0] sm:$0xf]
  %v131 = vld [vmem:[%s2 + $0x1a4] sm:$0xf]
  %v132 = vld [vmem:[%s2 + $0x1a8] sm:$0xf]
  %v133 = vld [vmem:[%s2 + $0x1ac] sm:$0xf]
  %v134 = vld [vmem:[%s2 + $0x1b0] sm:$0xf]
  %v135 = vld [vmem:[%s2 + $0x1b4] sm:$0xf]
  %v136 = vld [vmem:[%s2 + $0x1b8] sm:$0xf]
  %v137 = vld [vmem:[%s2 + $0x1bc] sm:$0xf]
  %v138 = vld [vmem:[%s2 + $0x1c0] sm:$0xf]
  %v139 = vld [vmem:[%s2 + $0x1c4] sm:$0xf]
  %v140 = vld [vmem:[%s2 + $0x1c8] sm:$0xf]
  %v141 = vld [vmem:[%s2 + $0x1cc] sm:$0xf]
  %v142 = vld [vmem:[%s2 + $0x1d0] sm:$0xf]
  %v143 = vld [vmem:[%s2 + $0x1d4] sm:$0xf]
  %v144 = vld [vmem:[%s2 + $0x1d8] sm:$0xf]
  %v145 = vld [vmem:[%s2 + $0x1dc] sm:$0xf]
  %v146 = vld [vmem:[%s2 + $0x1e0] sm:$0xf]
  %v147 = vld [vmem:[%s2 + $0x1e4] sm:$0xf]
  %v148 = vld [vmem:[%s2 + $0x1e8] sm:$0xf]
  %v149 = vld [vmem:[%s2 + $0x1ec] sm:$0xf]
  %v150 = vld [vmem:[%s2 + $0x1f0] sm:$0xf]
  %v151 = vld [vmem:[%s2 + $0x1f4] sm:$0xf]
  %v152 = vld [vmem:[%s2 + $0x1f8] sm:$0xf]
  %v153 = vld [vmem:[%s2 + $0x1fc] sm:$0xf]
  %v154 = vld [vmem:[%s1] sm:$0xff]
  %v155 = vld [vmem:[%s1 + $0x8] sm:$0xff]
  %v156 = vld [vmem:[%s1 + $0x10] sm:$0xff]
  %v157 = vld [vmem:[%s3] sm:$0xf]
  %v158 = vld [vmem:[%s3 + $0x4] sm:$0xf]
  %v159 = vld [vmem:[%s3 + $0x8] sm:$0xf]
  %v160 = vld [vmem:[%s3 + $0xc] sm:$0xf]
  %v161 = vld [vmem:[%s3 + $0x10] sm:$0xf]
  %v162 = vld [vmem:[%s3 + $0x14] sm:$0xf]
  %v163 = vld [vmem:[%s3 + $0x18] sm:$0xf]
  %v164 = vld [vmem:[%s3 + $0x1c] sm:$0xf]
  %v165 = vld [vmem:[%s3 + $0x20] sm:$0xf]
  %v166 = vld [vmem:[%s3 + $0x24] sm:$0xf]
  %v167 = vld [vmem:[%s3 + $0x28] sm:$0xf]
  %v168 = vld [vmem:[%s3 + $0x2c] sm:$0xf]
  %v169 = vld [vmem:[%s3 + $0x30] sm:$0xf]
  %v170 = vld [vmem:[%s3 + $0x34] sm:$0xf]
  %v171 = vld [vmem:[%s3 + $0x38] sm:$0xf]
  %v172 = vld [vmem:[%s3 + $0x3c] sm:$0xf]
  %v173 = vld [vmem:[%s3 + $0x40] sm:$0xf]
  %v174 = vld [vmem:[%s3 + $0x44] sm:$0xf]
  %v175 = vld [vmem:[%s3 + $0x48] sm:$0xf]
  %v176 = vld [vmem:[%s3 + $0x4c] sm:$0xf]
  %v177 = vld [vmem:[%s3 + $0x50] sm:$0xf]
  %v178 = vld [vmem:[%s3 + $0x54] sm:$0xf]
  %v179 = vld [vmem:[%s3 + $0x58] sm:$0xf]
  %v180 = vld [vmem:[%s3 + $0x5c] sm:$0xf]
  %v181 = vld [vmem:[%s3 + $0x60] sm:$0xf]
  %v182 = vld [vmem:[%s3 + $0x64] sm:$0xf]
  %v183 = vld [vmem:[%s3 + $0x68] sm:$0xf]
  %v184 = vld [vmem:[%s3 + $0x6c] sm:$0xf]
  %v185 = vld [vmem:[%s3 + $0x70] sm:$0xf]
  %v186 = vld [vmem:[%s3 + $0x74] sm:$0xf]
  %v187 = vld [vmem:[%s3 + $0x78] sm:$0xf]
  %v188 = vld [vmem:[%s3 + $0x7c] sm:$0xf]
  %v189 = vld [vmem:[%s3 + $0x80] sm:$0xf]
  %v190 = vld [vmem:[%s3 + $0x84] sm:$0xf]
  %v191 = vld [vmem:[%s3 + $0x88] sm:$0xf]
  %v192 = vld [vmem:[%s3 + $0x8c] sm:$0xf]
  %v193 = vld [vmem:[%s3 + $0x90] sm:$0xf]
  %v194 = vld [vmem:[%s3 + $0x94] sm:$0xf]
  %v195 = vld [vmem:[%s3 + $0x98] sm:$0xf]
  %v196 = vld [vmem:[%s3 + $0x9c] sm:$0xf]
  %v197 = vld [vmem:[%s3 + $0xa0] sm:$0xf]
  %v198 = vld [vmem:[%s3 + $0xa4] sm:$0xf]
  %v199 = vld [vmem:[%s3 + $0xa8] sm:$0xf]
  %v200 = vld [vmem:[%s3 + $0xac] sm:$0xf]
  %v201 = vld [vmem:[%s3 + $0xb0] sm:$0xf]
  %v202 = vld [vmem:[%s3 + $0xb4] sm:$0xf]
  %v203 = vld [vmem:[%s3 + $0xb8] sm:$0xf]
  %v204 = vld [vmem:[%s3 + $0xbc] sm:$0xf]
  %v205 = vld [vmem:[%s3 + $0xc0] sm:$0xf]
  %v206 = vld [vmem:[%s3 + $0xc4] sm:$0xf]
  %v207 = vld [vmem:[%s3 + $0xc8] sm:$0xf]
  %v208 = vld [vmem:[%s3 + $0xcc] sm:$0xf]
  %v209 = vld [vmem:[%s3 + $0xd0] sm:$0xf]
  %v210 = vld [vmem:[%s3 + $0xd4] sm:$0xf]
  %v211 = vld [vmem:[%s3 + $0xd8] sm:$0xf]
  %v212 = vld [vmem:[%s3 + $0xdc] sm:$0xf]
  %v213 = vld [vmem:[%s3 + $0xe0] sm:$0xf]
  %v214 = vld [vmem:[%s3 + $0xe4] sm:$0xf]
  %v215 = vld [vmem:[%s3 + $0xe8] sm:$0xf]
  %v216 = vld [vmem:[%s3 + $0xec] sm:$0xf]
  %v217 = vld [vmem:[%s3 + $0xf0] sm:$0xf]
  %v218 = vld [vmem:[%s3 + $0xf4] sm:$0xf]
  %v219 = vld [vmem:[%s3 + $0xf8] sm:$0xf]
  %v220 = vld [vmem:[%s3 + $0xfc] sm:$0xf]
  %v221 = vld [vmem:[%s3 + $0x100] sm:$0xf]
  %v222 = vld [vmem:[%s3 + $0x104] sm:$0xf]
  %v223 = vld [vmem:[%s3 + $0x108] sm:$0xf]
  %v224 = vld [vmem:[%s3 + $0x10c] sm:$0xf]
  %v225 = vld [vmem:[%s3 + $0x110] sm:$0xf]
  %v226 = vld [vmem:[%s3 + $0x114] sm:$0xf]
  %v227 = vld [vmem:[%s3 + $0x118] sm:$0xf]
  %v228 = vld [vmem:[%s3 + $0x11c] sm:$0xf]
  %v229 = vld [vmem:[%s3 + $0x120] sm:$0xf]
  %v230 = vld [vmem:[%s3 + $0x124] sm:$0xf]
  %v231 = vld [vmem:[%s3 + $0x128] sm:$0xf]
  %v232 = vld [vmem:[%s3 + $0x12c] sm:$0xf]
  %v233 = vld [vmem:[%s3 + $0x130] sm:$0xf]
  %v234 = vld [vmem:[%s3 + $0x134] sm:$0xf]
  %v235 = vld [vmem:[%s3 + $0x138] sm:$0xf]
  %v236 = vld [vmem:[%s3 + $0x13c] sm:$0xf]
  %v237 = vld [vmem:[%s3 + $0x140] sm:$0xf]
  %v238 = vld [vmem:[%s3 + $0x144] sm:$0xf]
  %v239 = vld [vmem:[%s3 + $0x148] sm:$0xf]
  %v240 = vld [vmem:[%s3 + $0x14c] sm:$0xf]
  %v241 = vld [vmem:[%s3 + $0x150] sm:$0xf]
  %v242 = vld [vmem:[%s3 + $0x154] sm:$0xf]
  %v243 = vld [vmem:[%s3 + $0x158] sm:$0xf]
  %v244 = vld [vmem:[%s3 + $0x15c] sm:$0xf]
  %v245 = vld [vmem:[%s3 + $0x160] sm:$0xf]
  %v246 = vld [vmem:[%s3 + $0x164] sm:$0xf]
  %v247 = vld [vmem:[%s3 + $0x168] sm:$0xf]
  %v248 = vld [vmem:[%s3 + $0x16c] sm:$0xf]
  %v249 = vld [vmem:[%s3 + $0x170] sm:$0xf]
  %v250 = vld [vmem:[%s3 + $0x174] sm:$0xf]
  %v251 = vld [vmem:[%s3 + $0x178] sm:$0xf]
  %v252 = vld [vmem:[%s3 + $0x17c] sm:$0xf]
  %v256 = vunpack.c.l.b16 %v154
  %v257 = vunpack.c.h.b16 %v154
  %v258 = vunpack.c.l.b16 %v155
  %v259 = vunpack.c.h.b16 %v155
  %v260 = vunpack.c.l.b16 %v156
  %v261 = vunpack.c.h.b16 %v156
  %v262 = vpack.c.b16 %v256, %v256
  %v263 = vpack.c.b16 %v257, %v257
  %v264 = vpack.c.b16 %v258, %v258
  %v265 = vpack.c.b16 %v259, %v259
  %v266 = vpack.c.b16 %v260, %v260
  %v267 = vpack.c.b16 %v261, %v261
  %v370 = vunpack.c.l.b16 %v157
  %v371 = vunpack.c.l.b16 %v158
  %v372 = vunpack.c.l.b16 %v159
  %v373 = vunpack.c.l.b16 %v160
  %v374 = vunpack.c.l.b16 %v161
  %v375 = vunpack.c.l.b16 %v162
  %v376 = vunpack.c.l.b16 %v163
  %v377 = vunpack.c.l.b16 %v164
  %v378 = vunpack.c.l.b16 %v165
  %v379 = vunpack.c.l.b16 %v166
  %v380 = vunpack.c.l.b16 %v167
  %v381 = vunpack.c.l.b16 %v168
  %v382 = vunpack.c.l.b16 %v169
  %v383 = vunpack.c.l.b16 %v170
  %v384 = vunpack.c.l.b16 %v171
  %v385 = vunpack.c.l.b16 %v172
  %v386 = vunpack.c.l.b16 %v173
  %v387 = vunpack.c.l.b16 %v174
  %v388 = vunpack.c.l.b16 %v175
  %v389 = vunpack.c.l.b16 %v176
  %v390 = vunpack.c.l.b16 %v177
  %v391 = vunpack.c.l.b16 %v178
  %v392 = vunpack.c.l.b16 %v179
  %v393 = vunpack.c.l.b16 %v180
  %v394 = vunpack.c.l.b16 %v181
  %v395 = vunpack.c.l.b16 %v182
  %v396 = vunpack.c.l.b16 %v183
  %v397 = vunpack.c.l.b16 %v184
  %v398 = vunpack.c.l.b16 %v185
  %v399 = vunpack.c.l.b16 %v186
  %v400 = vunpack.c.l.b16 %v187
  %v401 = vunpack.c.l.b16 %v188
  %v402 = vunpack.c.l.b16 %v189
  %v403 = vunpack.c.l.b16 %v190
  %v404 = vunpack.c.l.b16 %v191
  %v405 = vunpack.c.l.b16 %v192
  %v406 = vunpack.c.l.b16 %v193
  %v407 = vunpack.c.l.b16 %v194
  %v408 = vunpack.c.l.b16 %v195
  %v409 = vunpack.c.l.b16 %v196
  %v410 = vunpack.c.l.b16 %v197
  %v411 = vunpack.c.l.b16 %v198
  %v412 = vunpack.c.l.b16 %v199
  %v413 = vunpack.c.l.b16 %v200
  %v414 = vunpack.c.l.b16 %v201
  %v415 = vunpack.c.l.b16 %v202
  %v416 = vunpack.c.l.b16 %v203
  %v417 = vunpack.c.l.b16 %v204
  %v418 = vunpack.c.l.b16 %v205
  %v419 = vunpack.c.l.b16 %v206
  %v420 = vunpack.c.l.b16 %v207
  %v421 = vunpack.c.l.b16 %v208
  %v422 = vunpack.c.l.b16 %v209
  %v423 = vunpack.c.l.b16 %v210
  %v424 = vunpack.c.l.b16 %v211
  %v425 = vunpack.c.l.b16 %v212
  %v426 = vunpack.c.l.b16 %v213
  %v427 = vunpack.c.l.b16 %v214
  %v428 = vunpack.c.l.b16 %v215
  %v429 = vunpack.c.l.b16 %v216
  %v430 = vunpack.c.l.b16 %v217
  %v431 = vunpack.c.l.b16 %v218
  %v432 = vunpack.c.l.b16 %v219
  %v433 = vunpack.c.l.b16 %v220
  %v434 = vunpack.c.l.b16 %v221
  %v435 = vunpack.c.l.b16 %v222
  %v436 = vunpack.c.l.b16 %v223
  %v437 = vunpack.c.l.b16 %v224
  %v438 = vunpack.c.l.b16 %v225
  %v439 = vunpack.c.l.b16 %v226
  %v440 = vunpack.c.l.b16 %v227
  %v441 = vunpack.c.l.b16 %v228
  %v442 = vunpack.c.l.b16 %v229
  %v443 = vunpack.c.l.b16 %v230
  %v444 = vunpack.c.l.b16 %v231
  %v445 = vunpack.c.l.b16 %v232
  %v446 = vunpack.c.l.b16 %v233
  %v447 = vunpack.c.l.b16 %v234
  %v448 = vunpack.c.l.b16 %v235
  %v449 = vunpack.c.l.b16 %v236
  %v450 = vunpack.c.l.b16 %v237
  %v451 = vunpack.c.l.b16 %v238
  %v452 = vunpack.c.l.b16 %v239
  %v453 = vunpack.c.l.b16 %v240
  %v454 = vunpack.c.l.b16 %v241
  %v455 = vunpack.c.l.b16 %v242
  %v456 = vunpack.c.l.b16 %v243
  %v457 = vunpack.c.l.b16 %v244
  %v458 = vunpack.c.l.b16 %v245
  %v459 = vunpack.c.l.b16 %v246
  %v460 = vunpack.c.l.b16 %v247
  %v461 = vunpack.c.l.b16 %v248
  %v462 = vunpack.c.l.b16 %v249
  %v463 = vunpack.c.l.b16 %v250
  %v464 = vunpack.c.l.b16 %v251
  %v465 = vunpack.c.l.b16 %v252
  %v466 = vpack.c.b16 %v371, %v370
  %v467 = vpack.c.b16 %v373, %v372
  %v468 = vpack.c.b16 %v375, %v374
  %v469 = vpack.c.b16 %v377, %v376
  %v470 = vpack.c.b16 %v379, %v378
  %v471 = vpack.c.b16 %v381, %v380
  %v472 = vpack.c.b16 %v383, %v382
  %v473 = vpack.c.b16 %v385, %v384
  %v474 = vpack.c.b16 %v387, %v386
  %v475 = vpack.c.b16 %v389, %v388
  %v476 = vpack.c.b16 %v391, %v390
  %v477 = vpack.c.b16 %v393, %v392
  %v478 = vpack.c.b16 %v395, %v394
  %v479 = vpack.c.b16 %v397, %v396
  %v480 = vpack.c.b16 %v399, %v398
  %v481 = vpack.c.b16 %v401, %v400
  %v482 = vpack.c.b16 %v403, %v402
  %v483 = vpack.c.b16 %v405, %v404
  %v484 = vpack.c.b16 %v407, %v406
  %v485 = vpack.c.b16 %v409, %v408
  %v486 = vpack.c.b16 %v411, %v410
  %v487 = vpack.c.b16 %v413, %v412
  %v488 = vpack.c.b16 %v415, %v414
  %v489 = vpack.c.b16 %v417, %v416
  %v490 = vpack.c.b16 %v419, %v418
  %v491 = vpack.c.b16 %v421, %v420
  %v492 = vpack.c.b16 %v423, %v422
  %v493 = vpack.c.b16 %v425, %v424
  %v494 = vpack.c.b16 %v427, %v426
  %v495 = vpack.c.b16 %v429, %v428
  %v496 = vpack.c.b16 %v431, %v430
  %v497 = vpack.c.b16 %v433, %v432
  %v498 = vpack.c.b16 %v435, %v434
  %v499 = vpack.c.b16 %v437, %v436
  %v500 = vpack.c.b16 %v439, %v438
  %v501 = vpack.c.b16 %v441, %v440
  %v502 = vpack.c.b16 %v443, %v442
  %v503 = vpack.c.b16 %v445, %v444
  %v504 = vpack.c.b16 %v447, %v446
  %v505 = vpack.c.b16 %v449, %v448
  %v506 = vpack.c.b16 %v451, %v450
  %v507 = vpack.c.b16 %v453, %v452
  %v508 = vpack.c.b16 %v455, %v454
  %v509 = vpack.c.b16 %v457, %v456
  %v510 = vpack.c.b16 %v459, %v458
  %v511 = vpack.c.b16 %v461, %v460
  %v512 = vpack.c.b16 %v463, %v462
  %v513 = vpack.c.b16 %v465, %v464
  %562 = vmatprep.subr.bf16.mxu0 0
  %563 = vmatpush1.bf16.msra.mxu0 %v466
  %564 = vmatprep.subr.bf16.mxu0 0
  %565 = vmatpush1.bf16.msra.mxu0 %v467
  %566 = vmatprep.subr.bf16.mxu0 0
  %567 = vmatpush1.bf16.msra.mxu0 %v468
  %568 = vmatprep.subr.bf16.mxu0 0
  %569 = vmatpush1.bf16.msra.mxu0 %v469
  %570 = vmatprep.subr.bf16.mxu0 0
  %571 = vmatpush1.bf16.msra.mxu0 %v470
  %572 = vmatprep.subr.bf16.mxu0 0
  %573 = vmatpush1.bf16.msra.mxu0 %v471
  %574 = vmatprep.subr.bf16.mxu0 0
  %575 = vmatpush1.bf16.msra.mxu0 %v472
  %576 = vmatprep.subr.bf16.mxu0 0
  %577 = vmatpush1.bf16.msra.mxu0 %v473
  %578 = vmatprep.subr.bf16.mxu0 0
  %579 = vmatpush1.bf16.msra.mxu0 %v474
  %580 = vmatprep.subr.bf16.mxu0 0
  %581 = vmatpush1.bf16.msra.mxu0 %v475
  %582 = vmatprep.subr.bf16.mxu0 0
  %583 = vmatpush1.bf16.msra.mxu0 %v476
  %584 = vmatprep.subr.bf16.mxu0 0
  %585 = vmatpush1.bf16.msra.mxu0 %v477
  %586 = vmatprep.subr.bf16.mxu0 0
  %587 = vmatpush1.bf16.msra.mxu0 %v478
  %588 = vmatprep.subr.bf16.mxu0 0
  %589 = vmatpush1.bf16.msra.mxu0 %v479
  %590 = vmatprep.subr.bf16.mxu0 0
  %591 = vmatpush1.bf16.msra.mxu0 %v480
  %592 = vmatprep.subr.bf16.mxu0 0
  %593 = vmatpush1.bf16.msra.mxu0 %v481
  %594 = vmatprep.mubr.bf16.mxu0 %v263
  %595 = vmatmul.mubr.bf16.gmra.mrb[0].mxu0 %v262
  %v596 = vpop.f32.mrb[0].mxu0
  %v597 = vadd.f32 0.0, %v596
  %v598 = vpop.f32.mrb[0].mxu0
  %v599 = vpop.f32.mrb[0].mxu0
  %v600 = vpop.f32.mrb[0].mxu0
  %601 = vdwg.mxu0
  %602 = vmatprep.subr.bf16.mxu0 0
  %603 = vmatpush1.bf16.msra.mxu0 %v482
  %604 = vmatprep.subr.bf16.mxu0 0
  %605 = vmatpush1.bf16.msra.mxu0 %v483
  %606 = vmatprep.subr.bf16.mxu0 0
  %607 = vmatpush1.bf16.msra.mxu0 %v484
  %608 = vmatprep.subr.bf16.mxu0 0
  %609 = vmatpush1.bf16.msra.mxu0 %v485
  %610 = vmatprep.subr.bf16.mxu0 0
  %611 = vmatpush1.bf16.msra.mxu0 %v486
  %612 = vmatprep.subr.bf16.mxu0 0
  %613 = vmatpush1.bf16.msra.mxu0 %v487
  %614 = vmatprep.subr.bf16.mxu0 0
  %615 = vmatpush1.bf16.msra.mxu0 %v488
  %616 = vmatprep.subr.bf16.mxu0 0
  %617 = vmatpush1.bf16.msra.mxu0 %v489
  %618 = vmatprep.subr.bf16.mxu0 0
  %619 = vmatpush1.bf16.msra.mxu0 %v490
  %620 = vmatprep.subr.bf16.mxu0 0
  %621 = vmatpush1.bf16.msra.mxu0 %v491
  %622 = vmatprep.subr.bf16.mxu0 0
  %623 = vmatpush1.bf16.msra.mxu0 %v492
  %624 = vmatprep.subr.bf16.mxu0 0
  %625 = vmatpush1.bf16.msra.mxu0 %v493
  %626 = vmatprep.subr.bf16.mxu0 0
  %627 = vmatpush1.bf16.msra.mxu0 %v494
  %628 = vmatprep.subr.bf16.mxu0 0
  %629 = vmatpush1.bf16.msra.mxu0 %v495
  %630 = vmatprep.subr.bf16.mxu0 0
  %631 = vmatpush1.bf16.msra.mxu0 %v496
  %632 = vmatprep.subr.bf16.mxu0 0
  %633 = vmatpush1.bf16.msra.mxu0 %v497
  %634 = vmatprep.mubr.bf16.mxu0 %v265
  %635 = vmatmul.mubr.bf16.gmra.mrb[0].mxu0 %v264
  %v636 = vpop.f32.mrb[0].mxu0
  %v637 = vadd.f32 %v597, %v636
  %v638 = vpop.f32.mrb[0].mxu0
  %v639 = vpop.f32.mrb[0].mxu0
  %v640 = vpop.f32.mrb[0].mxu0
  %641 = vdwg.mxu0
  %642 = vmatprep.subr.bf16.mxu0 0
  %643 = vmatpush1.bf16.msra.mxu0 %v498
  %644 = vmatprep.subr.bf16.mxu0 0
  %645 = vmatpush1.bf16.msra.mxu0 %v499
  %646 = vmatprep.subr.bf16.mxu0 0
  %647 = vmatpush1.bf16.msra.mxu0 %v500
  %648 = vmatprep.subr.bf16.mxu0 0
  %649 = vmatpush1.bf16.msra.mxu0 %v501
  %650 = vmatprep.subr.bf16.mxu0 0
  %651 = vmatpush1.bf16.msra.mxu0 %v502
  %652 = vmatprep.subr.bf16.mxu0 0
  %653 = vmatpush1.bf16.msra.mxu0 %v503
  %654 = vmatprep.subr.bf16.mxu0 0
  %655 = vmatpush1.bf16.msra.mxu0 %v504
  %656 = vmatprep.subr.bf16.mxu0 0
  %657 = vmatpush1.bf16.msra.mxu0 %v505
  %658 = vmatprep.subr.bf16.mxu0 0
  %659 = vmatpush1.bf16.msra.mxu0 %v506
  %660 = vmatprep.subr.bf16.mxu0 0
  %661 = vmatpush1.bf16.msra.mxu0 %v507
  %662 = vmatprep.subr.bf16.mxu0 0
  %663 = vmatpush1.bf16.msra.mxu0 %v508
  %664 = vmatprep.subr.bf16.mxu0 0
  %665 = vmatpush1.bf16.msra.mxu0 %v509
  %666 = vmatprep.subr.bf16.mxu0 0
  %667 = vmatpush1.bf16.msra.mxu0 %v510
  %668 = vmatprep.subr.bf16.mxu0 0
  %669 = vmatpush1.bf16.msra.mxu0 %v511
  %670 = vmatprep.subr.bf16.mxu0 0
  %671 = vmatpush1.bf16.msra.mxu0 %v512
  %672 = vmatprep.subr.bf16.mxu0 0
  %673 = vmatpush1.bf16.msra.mxu0 %v513
  %674 = vmatprep.mubr.bf16.mxu0 %v267
  %675 = vmatmul.mubr.bf16.gmra.mrb[0].mxu0 %v266
  %v676 = vpop.f32.mrb[0].mxu0
  %v677 = vadd.f32 %v637, %v676
  %v678 = vpop.f32.mrb[0].mxu0
  %v679 = vpop.f32.mrb[0].mxu0
  %v680 = vpop.f32.mrb[0].mxu0
  %681 = vdwg.mxu0
  %v686 = vunpack.c.l.b16 %v22
  %v687 = vunpack.c.h.b16 %v22
  %v688 = vunpack.c.l.b16 %v23
  %v689 = vunpack.c.h.b16 %v23
  %v690 = vunpack.c.l.b16 %v24
  %v691 = vunpack.c.h.b16 %v24
  %v692 = vunpack.c.l.b16 %v25
  %v693 = vunpack.c.h.b16 %v25
  %v694 = vpack.c.b16 %v686, %v686
  %v695 = vpack.c.b16 %v687, %v687
  %v696 = vpack.c.b16 %v688, %v688
  %v697 = vpack.c.b16 %v689, %v689
  %v698 = vpack.c.b16 %v690, %v690
  %v699 = vpack.c.b16 %v691, %v691
  %v700 = vpack.c.b16 %v692, %v692
  %v701 = vpack.c.b16 %v693, %v693
  %v838 = vunpack.c.l.b16 %v26
  %v839 = vunpack.c.l.b16 %v27
  %v840 = vunpack.c.l.b16 %v28
  %v841 = vunpack.c.l.b16 %v29
  %v842 = vunpack.c.l.b16 %v30
  %v843 = vunpack.c.l.b16 %v31
  %v844 = vunpack.c.l.b16 %v32
  %v845 = vunpack.c.l.b16 %v33
  %v846 = vunpack.c.l.b16 %v34
  %v847 = vunpack.c.l.b16 %v35
  %v848 = vunpack.c.l.b16 %v36
  %v849 = vunpack.c.l.b16 %v37
  %v850 = vunpack.c.l.b16 %v38
  %v851 = vunpack.c.l.b16 %v39
  %v852 = vunpack.c.l.b16 %v40
  %v853 = vunpack.c.l.b16 %v41
  %v854 = vunpack.c.l.b16 %v42
  %v855 = vunpack.c.l.b16 %v43
  %v856 = vunpack.c.l.b16 %v44
  %v857 = vunpack.c.l.b16 %v45
  %v858 = vunpack.c.l.b16 %v46
  %v859 = vunpack.c.l.b16 %v47
  %v860 = vunpack.c.l.b16 %v48
  %v861 = vunpack.c.l.b16 %v49
  %v862 = vunpack.c.l.b16 %v50
  %v863 = vunpack.c.l.b16 %v51
  %v864 = vunpack.c.l.b16 %v52
  %v865 = vunpack.c.l.b16 %v53
  %v866 = vunpack.c.l.b16 %v54
  %v867 = vunpack.c.l.b16 %v55
  %v868 = vunpack.c.l.b16 %v56
  %v869 = vunpack.c.l.b16 %v57
  %v870 = vunpack.c.l.b16 %v58
  %v871 = vunpack.c.l.b16 %v59
  %v872 = vunpack.c.l.b16 %v60
  %v873 = vunpack.c.l.b16 %v61
  %v874 = vunpack.c.l.b16 %v62
  %v875 = vunpack.c.l.b16 %v63
  %v876 = vunpack.c.l.b16 %v64
  %v877 = vunpack.c.l.b16 %v65
  %v878 = vunpack.c.l.b16 %v66
  %v879 = vunpack.c.l.b16 %v67
  %v880 = vunpack.c.l.b16 %v68
  %v881 = vunpack.c.l.b16 %v69
  %v882 = vunpack.c.l.b16 %v70
  %v883 = vunpack.c.l.b16 %v71
  %v884 = vunpack.c.l.b16 %v72
  %v885 = vunpack.c.l.b16 %v73
  %v886 = vunpack.c.l.b16 %v74
  %v887 = vunpack.c.l.b16 %v75
  %v888 = vunpack.c.l.b16 %v76
  %v889 = vunpack.c.l.b16 %v77
  %v890 = vunpack.c.l.b16 %v78
  %v891 = vunpack.c.l.b16 %v79
  %v892 = vunpack.c.l.b16 %v80
  %v893 = vunpack.c.l.b16 %v81
  %v894 = vunpack.c.l.b16 %v82
  %v895 = vunpack.c.l.b16 %v83
  %v896 = vunpack.c.l.b16 %v84
  %v897 = vunpack.c.l.b16 %v85
  %v898 = vunpack.c.l.b16 %v86
  %v899 = vunpack.c.l.b16 %v87
  %v900 = vunpack.c.l.b16 %v88
  %v901 = vunpack.c.l.b16 %v89
  %v902 = vunpack.c.l.b16 %v90
  %v903 = vunpack.c.l.b16 %v91
  %v904 = vunpack.c.l.b16 %v92
  %v905 = vunpack.c.l.b16 %v93
  %v906 = vunpack.c.l.b16 %v94
  %v907 = vunpack.c.l.b16 %v95
  %v908 = vunpack.c.l.b16 %v96
  %v909 = vunpack.c.l.b16 %v97
  %v910 = vunpack.c.l.b16 %v98
  %v911 = vunpack.c.l.b16 %v99
  %v912 = vunpack.c.l.b16 %v100
  %v913 = vunpack.c.l.b16 %v101
  %v914 = vunpack.c.l.b16 %v102
  %v915 = vunpack.c.l.b16 %v103
  %v916 = vunpack.c.l.b16 %v104
  %v917 = vunpack.c.l.b16 %v105
  %v918 = vunpack.c.l.b16 %v106
  %v919 = vunpack.c.l.b16 %v107
  %v920 = vunpack.c.l.b16 %v108
  %v921 = vunpack.c.l.b16 %v109
  %v922 = vunpack.c.l.b16 %v110
  %v923 = vunpack.c.l.b16 %v111
  %v924 = vunpack.c.l.b16 %v112
  %v925 = vunpack.c.l.b16 %v113
  %v926 = vunpack.c.l.b16 %v114
  %v927 = vunpack.c.l.b16 %v115
  %v928 = vunpack.c.l.b16 %v116
  %v929 = vunpack.c.l.b16 %v117
  %v930 = vunpack.c.l.b16 %v118
  %v931 = vunpack.c.l.b16 %v119
  %v932 = vunpack.c.l.b16 %v120
  %v933 = vunpack.c.l.b16 %v121
  %v934 = vunpack.c.l.b16 %v122
  %v935 = vunpack.c.l.b16 %v123
  %v936 = vunpack.c.l.b16 %v124
  %v937 = vunpack.c.l.b16 %v125
  %v938 = vunpack.c.l.b16 %v126
  %v939 = vunpack.c.l.b16 %v127
  %v940 = vunpack.c.l.b16 %v128
  %v941 = vunpack.c.l.b16 %v129
  %v942 = vunpack.c.l.b16 %v130
  %v943 = vunpack.c.l.b16 %v131
  %v944 = vunpack.c.l.b16 %v132
  %v945 = vunpack.c.l.b16 %v133
  %v946 = vunpack.c.l.b16 %v134
  %v947 = vunpack.c.l.b16 %v135
  %v948 = vunpack.c.l.b16 %v136
  %v949 = vunpack.c.l.b16 %v137
  %v950 = vunpack.c.l.b16 %v138
  %v951 = vunpack.c.l.b16 %v139
  %v952 = vunpack.c.l.b16 %v140
  %v953 = vunpack.c.l.b16 %v141
  %v954 = vunpack.c.l.b16 %v142
  %v955 = vunpack.c.l.b16 %v143
  %v956 = vunpack.c.l.b16 %v144
  %v957 = vunpack.c.l.b16 %v145
  %v958 = vunpack.c.l.b16 %v146
  %v959 = vunpack.c.l.b16 %v147
  %v960 = vunpack.c.l.b16 %v148
  %v961 = vunpack.c.l.b16 %v149
  %v962 = vunpack.c.l.b16 %v150
  %v963 = vunpack.c.l.b16 %v151
  %v964 = vunpack.c.l.b16 %v152
  %v965 = vunpack.c.l.b16 %v153
  %v966 = vpack.c.b16 %v839, %v838
  %v967 = vpack.c.b16 %v841, %v840
  %v968 = vpack.c.b16 %v843, %v842
  %v969 = vpack.c.b16 %v845, %v844
  %v970 = vpack.c.b16 %v847, %v846
  %v971 = vpack.c.b16 %v849, %v848
  %v972 = vpack.c.b16 %v851, %v850
  %v973 = vpack.c.b16 %v853, %v852
  %v974 = vpack.c.b16 %v855, %v854
  %v975 = vpack.c.b16 %v857, %v856
  %v976 = vpack.c.b16 %v859, %v858
  %v977 = vpack.c.b16 %v861, %v860
  %v978 = vpack.c.b16 %v863, %v862
  %v979 = vpack.c.b16 %v865, %v864
  %v980 = vpack.c.b16 %v867, %v866
  %v981 = vpack.c.b16 %v869, %v868
  %v982 = vpack.c.b16 %v871, %v870
  %v983 = vpack.c.b16 %v873, %v872
  %v984 = vpack.c.b16 %v875, %v874
  %v985 = vpack.c.b16 %v877, %v876
  %v986 = vpack.c.b16 %v879, %v878
  %v987 = vpack.c.b16 %v881, %v880
  %v988 = vpack.c.b16 %v883, %v882
  %v989 = vpack.c.b16 %v885, %v884
  %v990 = vpack.c.b16 %v887, %v886
  %v991 = vpack.c.b16 %v889, %v888
  %v992 = vpack.c.b16 %v891, %v890
  %v993 = vpack.c.b16 %v893, %v892
  %v994 = vpack.c.b16 %v895, %v894
  %v995 = vpack.c.b16 %v897, %v896
  %v996 = vpack.c.b16 %v899, %v898
  %v997 = vpack.c.b16 %v901, %v900
  %v998 = vpack.c.b16 %v903, %v902
  %v999 = vpack.c.b16 %v905, %v904
  %v1000 = vpack.c.b16 %v907, %v906
  %v1001 = vpack.c.b16 %v909, %v908
  %v1002 = vpack.c.b16 %v911, %v910
  %v1003 = vpack.c.b16 %v913, %v912
  %v1004 = vpack.c.b16 %v915, %v914
  %v1005 = vpack.c.b16 %v917, %v916
  %v1006 = vpack.c.b16 %v919, %v918
  %v1007 = vpack.c.b16 %v921, %v920
  %v1008 = vpack.c.b16 %v923, %v922
  %v1009 = vpack.c.b16 %v925, %v924
  %v1010 = vpack.c.b16 %v927, %v926
  %v1011 = vpack.c.b16 %v929, %v928
  %v1012 = vpack.c.b16 %v931, %v930
  %v1013 = vpack.c.b16 %v933, %v932
  %v1014 = vpack.c.b16 %v935, %v934
  %v1015 = vpack.c.b16 %v937, %v936
  %v1016 = vpack.c.b16 %v939, %v938
  %v1017 = vpack.c.b16 %v941, %v940
  %v1018 = vpack.c.b16 %v943, %v942
  %v1019 = vpack.c.b16 %v945, %v944
  %v1020 = vpack.c.b16 %v947, %v946
  %v1021 = vpack.c.b16 %v949, %v948
  %v1022 = vpack.c.b16 %v951, %v950
  %v1023 = vpack.c.b16 %v953, %v952
  %v1024 = vpack.c.b16 %v955, %v954
  %v1025 = vpack.c.b16 %v957, %v956
  %v1026 = vpack.c.b16 %v959, %v958
  %v1027 = vpack.c.b16 %v961, %v960
  %v1028 = vpack.c.b16 %v963, %v962
  %v1029 = vpack.c.b16 %v965, %v964
  %1094 = vmatprep.subr.bf16.mxu0 0
  %1095 = vmatpush1.bf16.msra.mxu0 %v966
  %1096 = vmatprep.subr.bf16.mxu0 0
  %1097 = vmatpush1.bf16.msra.mxu0 %v967
  %1098 = vmatprep.subr.bf16.mxu0 0
  %1099 = vmatpush1.bf16.msra.mxu0 %v968
  %1100 = vmatprep.subr.bf16.mxu0 0
  %1101 = vmatpush1.bf16.msra.mxu0 %v969
  %1102 = vmatprep.subr.bf16.mxu0 0
  %1103 = vmatpush1.bf16.msra.mxu0 %v970
  %1104 = vmatprep.subr.bf16.mxu0 0
  %1105 = vmatpush1.bf16.msra.mxu0 %v971
  %1106 = vmatprep.subr.bf16.mxu0 0
  %1107 = vmatpush1.bf16.msra.mxu0 %v972
  %1108 = vmatprep.subr.bf16.mxu0 0
  %1109 = vmatpush1.bf16.msra.mxu0 %v973
  %1110 = vmatprep.subr.bf16.mxu0 0
  %1111 = vmatpush1.bf16.msra.mxu0 %v974
  %1112 = vmatprep.subr.bf16.mxu0 0
  %1113 = vmatpush1.bf16.msra.mxu0 %v975
  %1114 = vmatprep.subr.bf16.mxu0 0
  %1115 = vmatpush1.bf16.msra.mxu0 %v976
  %1116 = vmatprep.subr.bf16.mxu0 0
  %1117 = vmatpush1.bf16.msra.mxu0 %v977
  %1118 = vmatprep.subr.bf16.mxu0 0
  %1119 = vmatpush1.bf16.msra.mxu0 %v978
  %1120 = vmatprep.subr.bf16.mxu0 0
  %1121 = vmatpush1.bf16.msra.mxu0 %v979
  %1122 = vmatprep.subr.bf16.mxu0 0
  %1123 = vmatpush1.bf16.msra.mxu0 %v980
  %1124 = vmatprep.subr.bf16.mxu0 0
  %1125 = vmatpush1.bf16.msra.mxu0 %v981
  %1126 = vmatprep.mubr.bf16.mxu0 %v695
  %1127 = vmatmul.mubr.bf16.gmra.mrb[0].mxu0 %v694
  %v1128 = vpop.f32.mrb[0].mxu0
  %v1129 = vadd.f32 %v677, %v1128
  %v1130 = vpop.f32.mrb[0].mxu0
  %v1131 = vpop.f32.mrb[0].mxu0
  %v1132 = vpop.f32.mrb[0].mxu0
  %1133 = vdwg.mxu0
  %1134 = vmatprep.subr.bf16.mxu0 0
  %1135 = vmatpush1.bf16.msra.mxu0 %v982
  %1136 = vmatprep.subr.bf16.mxu0 0
  %1137 = vmatpush1.bf16.msra.mxu0 %v983
  %1138 = vmatprep.subr.bf16.mxu0 0
  %1139 = vmatpush1.bf16.msra.mxu0 %v984
  %1140 = vmatprep.subr.bf16.mxu0 0
  %1141 = vmatpush1.bf16.msra.mxu0 %v985
  %1142 = vmatprep.subr.bf16.mxu0 0
  %1143 = vmatpush1.bf16.msra.mxu0 %v986
  %1144 = vmatprep.subr.bf16.mxu0 0
  %1145 = vmatpush1.bf16.msra.mxu0 %v987
  %1146 = vmatprep.subr.bf16.mxu0 0
  %1147 = vmatpush1.bf16.msra.mxu0 %v988
  %1148 = vmatprep.subr.bf16.mxu0 0
  %1149 = vmatpush1.bf16.msra.mxu0 %v989
  %1150 = vmatprep.subr.bf16.mxu0 0
  %1151 = vmatpush1.bf16.msra.mxu0 %v990
  %1152 = vmatprep.subr.bf16.mxu0 0
  %1153 = vmatpush1.bf16.msra.mxu0 %v991
  %1154 = vmatprep.subr.bf16.mxu0 0
  %1155 = vmatpush1.bf16.msra.mxu0 %v992
  %1156 = vmatprep.subr.bf16.mxu0 0
  %1157 = vmatpush1.bf16.msra.mxu0 %v993
  %1158 = vmatprep.subr.bf16.mxu0 0
  %1159 = vmatpush1.bf16.msra.mxu0 %v994
  %1160 = vmatprep.subr.bf16.mxu0 0
  %1161 = vmatpush1.bf16.msra.mxu0 %v995
  %1162 = vmatprep.subr.bf16.mxu0 0
  %1163 = vmatpush1.bf16.msra.mxu0 %v996
  %1164 = vmatprep.subr.bf16.mxu0 0
  %1165 = vmatpush1.bf16.msra.mxu0 %v997
  %1166 = vmatprep.mubr.bf16.mxu0 %v697
  %1167 = vmatmul.mubr.bf16.gmra.mrb[0].mxu0 %v696
  %v1168 = vpop.f32.mrb[0].mxu0
  %v1169 = vadd.f32 %v1129, %v1168
  %v1170 = vpop.f32.mrb[0].mxu0
  %v1171 = vpop.f32.mrb[0].mxu0
  %v1172 = vpop.f32.mrb[0].mxu0
  %1173 = vdwg.mxu0
  %1174 = vmatprep.subr.bf16.mxu0 0
  %1175 = vmatpush1.bf16.msra.mxu0 %v998
  %1176 = vmatprep.subr.bf16.mxu0 0
  %1177 = vmatpush1.bf16.msra.mxu0 %v999
  %1178 = vmatprep.subr.bf16.mxu0 0
  %1179 = vmatpush1.bf16.msra.mxu0 %v1000
  %1180 = vmatprep.subr.bf16.mxu0 0
  %1181 = vmatpush1.bf16.msra.mxu0 %v1001
  %1182 = vmatprep.subr.bf16.mxu0 0
  %1183 = vmatpush1.bf16.msra.mxu0 %v1002
  %1184 = vmatprep.subr.bf16.mxu0 0
  %1185 = vmatpush1.bf16.msra.mxu0 %v1003
  %1186 = vmatprep.subr.bf16.mxu0 0
  %1187 = vmatpush1.bf16.msra.mxu0 %v1004
  %1188 = vmatprep.subr.bf16.mxu0 0
  %1189 = vmatpush1.bf16.msra.mxu0 %v1005
  %1190 = vmatprep.subr.bf16.mxu0 0
  %1191 = vmatpush1.bf16.msra.mxu0 %v1006
  %1192 = vmatprep.subr.bf16.mxu0 0
  %1193 = vmatpush1.bf16.msra.mxu0 %v1007
  %1194 = vmatprep.subr.bf16.mxu0 0
  %1195 = vmatpush1.bf16.msra.mxu0 %v1008
  %1196 = vmatprep.subr.bf16.mxu0 0
  %1197 = vmatpush1.bf16.msra.mxu0 %v1009
  %1198 = vmatprep.subr.bf16.mxu0 0
  %1199 = vmatpush1.bf16.msra.mxu0 %v1010
  %1200 = vmatprep.subr.bf16.mxu0 0
  %1201 = vmatpush1.bf16.msra.mxu0 %v1011
  %1202 = vmatprep.subr.bf16.mxu0 0
  %1203 = vmatpush1.bf16.msra.mxu0 %v1012
  %1204 = vmatprep.subr.bf16.mxu0 0
  %1205 = vmatpush1.bf16.msra.mxu0 %v1013
  %1206 = vmatprep.mubr.bf16.mxu0 %v699
  %1207 = vmatmul.mubr.bf16.gmra.mrb[0].mxu0 %v698
  %v1208 = vpop.f32.mrb[0].mxu0
  %v1209 = vadd.f32 %v1169, %v1208
  %v1210 = vpop.f32.mrb[0].mxu0
  %v1211 = vpop.f32.mrb[0].mxu0
  %v1212 = vpop.f32.mrb[0].mxu0
  %1213 = vdwg.mxu0
  %1214 = vmatprep.subr.bf16.mxu0 0
  %1215 = vmatpush1.bf16.msra.mxu0 %v1014
  %1216 = vmatprep.subr.bf16.mxu0 0
  %1217 = vmatpush1.bf16.msra.mxu0 %v1015
  %1218 = vmatprep.subr.bf16.mxu0 0
  %1219 = vmatpush1.bf16.msra.mxu0 %v1016
  %1220 = vmatprep.subr.bf16.mxu0 0
  %1221 = vmatpush1.bf16.msra.mxu0 %v1017
  %1222 = vmatprep.subr.bf16.mxu0 0
  %1223 = vmatpush1.bf16.msra.mxu0 %v1018
  %1224 = vmatprep.subr.bf16.mxu0 0
  %1225 = vmatpush1.bf16.msra.mxu0 %v1019
  %1226 = vmatprep.subr.bf16.mxu0 0
  %1227 = vmatpush1.bf16.msra.mxu0 %v1020
  %1228 = vmatprep.subr.bf16.mxu0 0
  %1229 = vmatpush1.bf16.msra.mxu0 %v1021
  %1230 = vmatprep.subr.bf16.mxu0 0
  %1231 = vmatpush1.bf16.msra.mxu0 %v1022
  %1232 = vmatprep.subr.bf16.mxu0 0
  %1233 = vmatpush1.bf16.msra.mxu0 %v1023
  %1234 = vmatprep.subr.bf16.mxu0 0
  %1235 = vmatpush1.bf16.msra.mxu0 %v1024
  %1236 = vmatprep.subr.bf16.mxu0 0
  %1237 = vmatpush1.bf16.msra.mxu0 %v1025
  %1238 = vmatprep.subr.bf16.mxu0 0
  %1239 = vmatpush1.bf16.msra.mxu0 %v1026
  %1240 = vmatprep.subr.bf16.mxu0 0
  %1241 = vmatpush1.bf16.msra.mxu0 %v1027
  %1242 = vmatprep.subr.bf16.mxu0 0
  %1243 = vmatpush1.bf16.msra.mxu0 %v1028
  %1244 = vmatprep.subr.bf16.mxu0 0
  %1245 = vmatpush1.bf16.msra.mxu0 %v1029
  %1246 = vmatprep.mubr.bf16.mxu0 %v701
  %1247 = vmatmul.mubr.bf16.gmra.mrb[0].mxu0 %v700
  %v1248 = vpop.f32.mrb[0].mxu0
  %v1249 = vadd.f32 %v1209, %v1248
  %v1250 = vpop.f32.mrb[0].mxu0
  %v1251 = vpop.f32.mrb[0].mxu0
  %v1252 = vpop.f32.mrb[0].mxu0
  %1253 = vdwg.mxu0
  %s1254 = sld [smem:[#allocation2]]
  %v1255 = vstv %s1254
  %v1256 = vadd.f32 %v1249, %v1255
  %vm1257 = vcmask 7168
  %1258 = vst.msk [vmem:[%s5] sm:$0xff] %vm1257, %v1256
  // Predicated region
  $region22: #{tpu_custom_call.1} parent=0 // pred_check
    _
  $region23: #{tpu_custom_call.1} parent=0 // pred_check_branch
    %1260 = sbr.rel (0) target = $region25
  $region24: #{tpu_custom_call.1} parent=0 // pred_region
    _
  $region25: #{tpu_custom_call.1} parent=0 // pred_fallthru
    _
  // Predicated region
  $region26: #{tpu_custom_call.1} parent=0 // pred_check
    _
  $region27: #{tpu_custom_call.1} parent=0 // pred_check_branch
    %1262 = sbr.rel (0) target = $region29
  $region28: #{tpu_custom_call.1} parent=0 // pred_region
    _
  $region29: #{tpu_custom_call.1} parent=0 // pred_fallthru
    _

</llo_original>
